<compile_context>
chip_gen: v6e
topology: v6e:2x2x1
jax: 0.10.0
libtpu: 0.0.40
codegen_flags: <defaults>
</compile_context>

<pallas_src>
import jax
import jax.numpy as jnp
from jax.experimental import pallas as pl
from jax.experimental.pallas import tpu as pltpu


def _round_up(x, m):
    return (x + m - 1) // m * m


def _physical_vmem_bytes():
    """Best-effort physical VMEM query; falls back to the smallest (v7x)."""
    try:
        info = pltpu.get_tpu_info()
        for name in ("vmem_capacity_bytes", "vmem_bytes", "vmem_size_bytes"):
            v = getattr(info, name, None)
            if v:
                return int(v)
    except Exception:
        pass
    return 64 * 1024 * 1024


def cat_embedding_kernel(x_ref, w_ref, b_ref, o_ref):
    # x_ref: (TB, C, HW)  activations, native NCHW layout (HW on lanes)
    # w_ref: (C, E)       embedding_layer.weight^T with 1/HW pool scale folded in
    # b_ref: (1, E)       embedding_layer.bias (NOT pool-scaled)
    # o_ref: (TB, E)      L2-normalized embeddings
    x = x_ref[...].astype(jnp.float32)              # f32 accumulation path
    # "backbone": global average pool over spatial positions (scale lives in w).
    feats = jnp.sum(x, axis=-1)                     # (TB, C)  lane reduce (XLU)
    # embedding_layer: feats @ W^T + b   (MXU matmul, f32 accumulate)
    emb = jnp.dot(feats, w_ref[...],
                  preferred_element_type=jnp.float32) + b_ref[...]
    # F.normalize(emb, p=2, dim=1): emb / max(||emb||, 1e-12)
    sq = jnp.sum(emb * emb, axis=-1, keepdims=True)
    inv = jax.lax.rsqrt(jnp.maximum(sq, 1e-24))     # EUP rsqrt (free slot)
    o_ref[...] = (emb * inv).astype(o_ref.dtype)


def cat_embedding_forward(x_nchw, weight, bias):
    """x_nchw: (B, C, H, W) activations (bf16 recommended, any float works);
    weight: (E, C) torch-style Linear weight; bias: (E,)."""
    B, C, H, W = x_nchw.shape
    E = weight.shape[0]
    HW = H * W

    # Native layout: contiguous reshape, no HBM copy, no transpose pass.
    x = x_nchw.reshape(B, C, HW)
    itemsize = jnp.dtype(x.dtype).itemsize

    # Fold the 1/HW pool scale into the transposed weight; bias is NOT pooled.
    w_t = weight.T.astype(jnp.float32) / float(HW)          # (C, E)
    b2 = bias.reshape(1, E).astype(jnp.float32)

    # ---- generation-aware tile sizing with layout-padded footprints -------
    phys_vmem = _physical_vmem_bytes()
    budget = (phys_vmem * 3) // 4        # ~96 MiB v5e/v6e, ~48 MiB v7x

    sub_x = 8 * max(1, 4 // itemsize)    # sublane multiple (16 for bf16)
    pad_c = _round_up(C, sub_x)
    pad_hw = _round_up(HW, 128)
    pad_e = _round_up(E, 128)

    x_row = pad_c * pad_hw * itemsize                 # one sample's DMA tile
    x_row_f32 = (_round_up(C, 8) * pad_hw * 4) if itemsize < 4 else 0
    out_row = pad_e * 4
    w_bytes = _round_up(C, 8) * pad_e * 4             # resident (const index)
    b_bytes = 8 * pad_e * 4
    margin = 2 * 1024 * 1024                          # Mosaic internal scratch

    per_row = 2 * x_row + x_row_f32 + 2 * out_row     # dbl-buf x/out + temp
    avail = max(budget - w_bytes - b_bytes - margin, per_row * 8)
    tb = max(8, (avail // per_row) // 8 * 8)

    # >= 2 grid steps when there is enough batch: feeds both TensorCores on
    # v7x; negligible cost on 1-TC chips.
    if B >= 16:
        tb = min(tb, _round_up(pl.cdiv(B, 2), 8))
    if tb >= B:
        tb = B                                        # single exact block
    grid = (pl.cdiv(B, tb),)

    tb_pad = _round_up(tb, 8)
    vmem_need = (2 * tb * x_row + tb * x_row_f32
                 + w_bytes + b_bytes + 2 * tb_pad * out_row)
    vmem_limit = int(min(phys_vmem - (8 << 20),
                         max(vmem_need + (4 << 20), 16 << 20)))

    cost = pl.CostEstimate(
        flops=2 * B * C * E + B * C * HW + 3 * B * E,
        transcendentals=B,
        bytes_accessed=B * C * HW * itemsize + C * E * 4 + E * 4 + B * E * 4,
    )

    out = pl.pallas_call(
        cat_embedding_kernel,
        out_shape=jax.ShapeDtypeStruct((B, E), jnp.float32),
        grid=grid,
        in_specs=[
            pl.BlockSpec((tb, C, HW), lambda i: (i, 0, 0)),   # batch-tiled x
            pl.BlockSpec((C, E), lambda i: (0, 0)),           # resident W^T
            pl.BlockSpec((1, E), lambda i: (0, 0)),           # resident bias
        ],
        out_specs=pl.BlockSpec((tb, E), lambda i: (i, 0)),
        compiler_params=pltpu.CompilerParams(
            dimension_semantics=("parallel",),
            vmem_limit_bytes=vmem_limit,
        ),
        cost_estimate=cost,
    )(x, w_t, b2)

    return out


if __name__ == "__main__":
    # Small, TPU-friendly shapes consistent with the forward pass:
    # batch=2, "backbone" channels (=in_features)=32, spatial=16x16,
    # embedding_size=128.
    B, C, H, W = 2, 32, 16, 16
    E = 128

    key = jax.random.PRNGKey(0)
    kx, kw = jax.random.split(key)

    # Producer-side bf16 activations (halves HBM traffic of the dominant
    # stream); the kernel accumulates in f32.
    x = jax.random.normal(kx, (B, C, H, W), dtype=jnp.bfloat16)

    # Deterministic init matching _initialize_weights():
    #   kaiming_normal_(weight, mode='fan_out', nonlinearity='relu')
    #     -> std = sqrt(2 / fan_out) = sqrt(2 / E), weight shape (E, C)
    #   bias = 0
    w_std = (2.0 / E) ** 0.5
    weight = jax.random.normal(kw, (E, C), dtype=jnp.float32) * w_std
    bias = jnp.zeros((E,), dtype=jnp.float32)

    out = cat_embedding_forward(x, weight, bias)
    out = jax.block_until_ready(out)

    # Pure-JAX reference: mean-pool -> linear -> L2 normalize (same bf16->f32
    # upcast path as the kernel).
    x32 = x.astype(jnp.float32)
    feats_ref = jnp.mean(x32.reshape(B, C, H * W), axis=-1)        # (B, C)
    emb_ref = feats_ref @ weight.T + bias
    nrm = jnp.maximum(jnp.linalg.norm(emb_ref, axis=-1, keepdims=True), 1e-12)
    ref = emb_ref / nrm

    assert out.shape == (B, E)
    assert bool(jnp.all(jnp.abs(out - ref) < 5e-4))
    row_norms = jnp.sqrt(jnp.sum(out * out, axis=-1))
    assert bool(jnp.all(jnp.abs(row_norms - 1.0) < 1e-3))

    print("KERNEL_OK")
</pallas_src>

<mosaic_0001>
module attributes {stable_mosaic.version = 11 : i64} {
  func.func @cat_embedding_kernel(%arg0: i32, %arg1: memref<2x32x256xbf16, #tpu.memory_space<vmem>>, %arg2: memref<32x128xf32, #tpu.memory_space<vmem>>, %arg3: memref<1x128xf32, #tpu.memory_space<vmem>>, %arg4: memref<2x128xf32, #tpu.memory_space<vmem>>) attributes {dimension_semantics = [#tpu.dimension_semantics<parallel>], iteration_bounds = array<i64: 1>, scalar_prefetch = 0 : i64, scratch_operands = 0 : i64, tpu.core_type = #tpu.core_type<tc>, window_params = [{transform_indices = @transform_0, window_bounds = array<i64: 2, 32, 256>}, {pipeline_mode = #tpu.pipeline_mode<synchronous>, transform_indices = @transform_1, window_bounds = array<i64: 32, 128>}, {pipeline_mode = #tpu.pipeline_mode<synchronous>, transform_indices = @transform_2, window_bounds = array<i64: 1, 128>}, {transform_indices = @transform_3, window_bounds = array<i64: 2, 128>}]} {
    %c0 = arith.constant 0 : index
    %c0_0 = arith.constant 0 : index
    %c0_1 = arith.constant 0 : index
    %0 = vector.load %arg1[%c0, %c0_0, %c0_1] : memref<2x32x256xbf16, #tpu.memory_space<vmem>>, vector<2x32x256xbf16>
    %1 = arith.extf %0 : vector<2x32x256xbf16> to vector<2x32x256xf32>
    %cst = arith.constant dense<0.000000e+00> : vector<2x32xf32>
    %2 = vector.multi_reduction <add>, %1, %cst [2] : vector<2x32x256xf32> to vector<2x32xf32>
    %c0_2 = arith.constant 0 : index
    %c0_3 = arith.constant 0 : index
    %3 = vector.load %arg2[%c0_2, %c0_3] : memref<32x128xf32, #tpu.memory_space<vmem>>, vector<32x128xf32>
    %cst_4 = arith.constant dense<0.000000e+00> : vector<2x128xf32>
    %4 = tpu.matmul %2, %3, %cst_4 {dimension_numbers = #tpu.dot_dimension_numbers<[1], [0], [0], [1], [0, 0, 1, 1], [], []>} : vector<2x32xf32>, vector<32x128xf32>, vector<2x128xf32> -> vector<2x128xf32>
    %c0_5 = arith.constant 0 : index
    %c0_6 = arith.constant 0 : index
    %5 = vector.load %arg3[%c0_5, %c0_6] : memref<1x128xf32, #tpu.memory_space<vmem>>, vector<1x128xf32>
    %6 = vector.broadcast %5 : vector<1x128xf32> to vector<2x128xf32>
    %7 = arith.addf %4, %6 : vector<2x128xf32>
    %8 = arith.mulf %7, %7 : vector<2x128xf32>
    %cst_7 = arith.constant dense<0.000000e+00> : vector<2xf32>
    %9 = vector.multi_reduction <add>, %8, %cst_7 [1] : vector<2x128xf32> to vector<2xf32>
    %10 = vector.shape_cast %9 : vector<2xf32> to vector<2x1xf32>
    %cst_8 = arith.constant 1.000000e-24 : f32
    %11 = vector.broadcast %cst_8 : f32 to vector<2x1xf32>
    %12 = arith.maximumf %10, %11 : vector<2x1xf32>
    %13 = math.rsqrt %12 : vector<2x1xf32>
    %14 = vector.broadcast %13 : vector<2x1xf32> to vector<2x128xf32>
    %15 = arith.mulf %7, %14 : vector<2x128xf32>
    %c0_9 = arith.constant 0 : index
    %c0_10 = arith.constant 0 : index
    %16 = vector.load %arg4[%c0_9, %c0_10] : memref<2x128xf32, #tpu.memory_space<vmem>>, vector<2x128xf32>
    tpu.vector_store %arg4[%c0_9, %c0_10], %15 {strides = array<i32>} : memref<2x128xf32, #tpu.memory_space<vmem>>, vector<2x128xf32>,
    return
  }
  func.func @transform_0(%arg0: i32) -> (i32, i32, i32) {
    %c0_i32 = arith.constant 0 : i32
    %c0_i32_0 = arith.constant 0 : i32
    %c0_i32_1 = arith.constant 0 : i32
    return %arg0, %c0_i32, %c0_i32_0 : i32, i32, i32
  }
  func.func @transform_1(%arg0: i32) -> (i32, i32) {
    %c0_i32 = arith.constant 0 : i32
    %c0_i32_0 = arith.constant 0 : i32
    %c0_i32_1 = arith.constant 0 : i32
    return %c0_i32, %c0_i32_0 : i32, i32
  }
  func.func @transform_2(%arg0: i32) -> (i32, i32) {
    %c0_i32 = arith.constant 0 : i32
    %c0_i32_0 = arith.constant 0 : i32
    %c0_i32_1 = arith.constant 0 : i32
    return %c0_i32, %c0_i32_0 : i32, i32
  }
  func.func @transform_3(%arg0: i32) -> (i32, i32) {
    %c0_i32 = arith.constant 0 : i32
    %c0_i32_0 = arith.constant 0 : i32
    return %arg0, %c0_i32 : i32, i32
  }
}

</mosaic_0001>

<llo_original>
// kernel: tpu_custom_call.1
$region0: #{tpu_custom_call.1}
  #allocation0 [shape = 'u32[]', space=smem, size = 0x4, offset = 0x4, fixed_abs, tag = 'smem constant byte address 0x4 - core index']
  #allocation1 [shape = 'u32[144,128]{1,0:T(1,128)}', space=vmem, size = 0x12000, scoped, tag = 'internal scratch']
  %s0 = inlined_call_operand.hbm [shape: bf16[2,32,256], index: 0, kind: input, shape index: {}]
  %s1 = inlined_call_operand.hbm [shape: f32[32,128], index: 1, kind: input, shape index: {}]
  %s2 = inlined_call_operand.vmem [shape: f32[1,128], index: 2, kind: input, shape index: {}]
  %s3 = inlined_call_operand.hbm [shape: f32[2,128], index: 3, kind: output, shape index: {}]
  %s4 = sld [smem:[#allocation0]]
  $region30: #{tpu_custom_call.1} parent=0
    _
  %s6 = ssub.s32 1, %s4
  %s7 = scalar_select 0, %s6, %s4
  $region1: #{tpu_custom_call.1} parent=0
    #allocation2 [shape = 'u8[32768]{0}', space=vmem, size = 0x8000, scoped, tag = 'input window, operand 0, single buffered']
    #allocation3 [shape = 's32[1]{0}', space=sflag, size = 0x4, scoped, tag = 'scoped memory for tpu_custom_call.1']
    #allocation4 [shape = 's32[1]{0}', space=sflag, size = 0x4, scoped, tag = 'scoped memory for tpu_custom_call.1']
    #allocation5 [shape = 'u8[16384]{0}', space=vmem, size = 0x4000, scoped, tag = 'input window, operand 1, single buffered']
    #allocation6 [shape = 's32[1]{0}', space=sflag, size = 0x4, scoped, tag = 'scoped memory for tpu_custom_call.1']
    #allocation7 [shape = 'u8[1024]{0}', space=vmem, size = 0x400, scoped, tag = 'output window, operand 0, single buffered']
    %8 = vsyncpa [#allocation3], 0
    %9 = vsyncpa [#allocation6], 0
    %10 = vsyncpa [#allocation4], 0
    // Predicated region
    $region2: #{tpu_custom_call.1} parent=1 // pred_check
      _
    $region3: #{tpu_custom_call.1} parent=1 // pred_check_branch
      %12 = sbr.rel (0) target = $region5
    $region4: #{tpu_custom_call.1} parent=1 // pred_region
      %s14 = ssub.s32 1024, 1024
      %15 = vsyncadd [#allocation3], %s14
      %s16 = sshll.u32 [#allocation2], 4
      %s17 = int_to_ptr.vmem [resolvable:$true] %s16
      %22 = dma.hbm_to_vmem [thread:$0]  %s0, 1024, %s17, [#allocation3], 128, 128, 8
    $region5: #{tpu_custom_call.1} parent=1 // pred_fallthru
      _
    // Predicated region
    $region6: #{tpu_custom_call.1} parent=1 // pred_check
      _
    $region7: #{tpu_custom_call.1} parent=1 // pred_check_branch
      %24 = sbr.rel (0) target = $region9
    $region8: #{tpu_custom_call.1} parent=1 // pred_region
      %s26 = ssub.s32 512, 512
      %27 = vsyncadd [#allocation6], %s26
      %s28 = sshll.u32 [#allocation5], 4
      %s29 = int_to_ptr.vmem [resolvable:$true] %s28
      %34 = dma.hbm_to_vmem [thread:$0]  %s1, 512, %s29, [#allocation6], 128, 128, 8
    $region9: #{tpu_custom_call.1} parent=1 // pred_fallthru
      _
    // Predicated region
    $region10: #{tpu_custom_call.1} parent=1 // pred_check
      _
    $region11: #{tpu_custom_call.1} parent=1 // pred_check_branch
      %36 = sbr.rel (0) target = $region13
    $region12: #{tpu_custom_call.1} parent=1 // pred_region
      _
    $region13: #{tpu_custom_call.1} parent=1 // pred_fallthru
      _
    // Predicated region
    $region14: #{tpu_custom_call.1} parent=1 // pred_check
      _
    $region15: #{tpu_custom_call.1} parent=1 // pred_check_branch
      %38 = sbr.rel (0) target = $region17
    $region16: #{tpu_custom_call.1} parent=1 // pred_region
      %39 = dma.done [#allocation3], 1024
    $region17: #{tpu_custom_call.1} parent=1 // pred_fallthru
      _
    // Predicated region
    $region18: #{tpu_custom_call.1} parent=1 // pred_check
      _
    $region19: #{tpu_custom_call.1} parent=1 // pred_check_branch
      %41 = sbr.rel (0) target = $region21
    $region20: #{tpu_custom_call.1} parent=1 // pred_region
      %42 = dma.done [#allocation6], 512
    $region21: #{tpu_custom_call.1} parent=1 // pred_fallthru
      _
    %v43 = vld [vmem:[#allocation2] sm:$0xff]
    %v44 = vld [vmem:[#allocation2 + $0x8] sm:$0xff]
    %v45 = vld [vmem:[#allocation2 + $0x10] sm:$0xff]
    %v46 = vld [vmem:[#allocation2 + $0x18] sm:$0xff]
    %v47 = vld [vmem:[#allocation2 + $0x20] sm:$0xff]
    %v48 = vld [vmem:[#allocation2 + $0x28] sm:$0xff]
    %v49 = vld [vmem:[#allocation2 + $0x30] sm:$0xff]
    %v50 = vld [vmem:[#allocation2 + $0x38] sm:$0xff]
    %v51 = vunpack.c.l.bf16 %v43
    %v52 = vunpack.c.h.bf16 %v43
    %v53 = vunpack.c.l.bf16 %v44
    %v54 = vunpack.c.h.bf16 %v44
    %v55 = vunpack.c.l.bf16 %v45
    %v56 = vunpack.c.h.bf16 %v45
    %v57 = vunpack.c.l.bf16 %v46
    %v58 = vunpack.c.h.bf16 %v46
    %v59 = vunpack.c.l.bf16 %v47
    %v60 = vunpack.c.h.bf16 %v47
    %v61 = vunpack.c.l.bf16 %v48
    %v62 = vunpack.c.h.bf16 %v48
    %v63 = vunpack.c.l.bf16 %v49
    %v64 = vunpack.c.h.bf16 %v49
    %v65 = vunpack.c.l.bf16 %v50
    %v66 = vunpack.c.h.bf16 %v50
    %v67 = vadd.f32 %v51, %v52
    %68 = vadd.xlane.f32.xlu0 %v67
    %v69 = vpop.xlane.xlu0 %68
    %v70 = vadd.f32 %v53, %v54
    %71 = vadd.xlane.f32.xlu0 %v70
    %v72 = vpop.xlane.xlu0 %71
    %v73 = vadd.f32 %v55, %v56
    %74 = vadd.xlane.f32.xlu0 %v73
    %v75 = vpop.xlane.xlu0 %74
    %v76 = vadd.f32 %v57, %v58
    %77 = vadd.xlane.f32.xlu0 %v76
    %v78 = vpop.xlane.xlu0 %77
    %v79 = vadd.f32 %v59, %v60
    %80 = vadd.xlane.f32.xlu0 %v79
    %v81 = vpop.xlane.xlu0 %80
    %v82 = vadd.f32 %v61, %v62
    %83 = vadd.xlane.f32.xlu0 %v82
    %v84 = vpop.xlane.xlu0 %83
    %v85 = vadd.f32 %v63, %v64
    %86 = vadd.xlane.f32.xlu0 %v85
    %v87 = vpop.xlane.xlu0 %86
    %v88 = vadd.f32 %v65, %v66
    %89 = vadd.xlane.f32.xlu0 %v88
    %v90 = vpop.xlane.xlu0 %89
    %v91 = vld [vmem:[#allocation5] sm:$0xff]
    %v92 = vld [vmem:[#allocation5 + $0x8] sm:$0xff]
    %v93 = vld [vmem:[#allocation5 + $0x10] sm:$0xff]
    %v94 = vld [vmem:[#allocation5 + $0x18] sm:$0xff]
    %v95 = vld [vmem:[%s2] sm:$0x1]
    %v97 = vlaneseq
    %v98 = vshrl.u32 %v97, 7
    %v99 = vsub.s32 0, %v98
    %v100 = vrot.slane %v95, %v99
    %v110 = vlaneseq
    %v111 = vand.u32 %v110, 127
    %v112 = vlaneseq
    %v113 = vshrl.u32 %v112, 7
    %v114 = vsub.s32 %v111, %v113
    %v115 = vrot.slane %v69, %v114
    %v116 = vadd.s32 %v111, 4294967288
    %v117 = vlaneseq
    %v118 = vshrl.u32 %v117, 7
    %v119 = vsub.s32 %v116, %v118
    %v120 = vrot.slane %v72, %v119
    %vm121 = vcmask 130112
    %v122 = vsel %vm121, %v120, %v115
    %v123 = vadd.s32 %v111, 4294967280
    %v124 = vlaneseq
    %v125 = vshrl.u32 %v124, 7
    %v126 = vsub.s32 %v123, %v125
    %v127 = vrot.slane %v75, %v126
    %vm128 = vcmask 195712
    %v129 = vsel %vm128, %v127, %v122
    %v130 = vadd.s32 %v111, 4294967272
    %v131 = vlaneseq
    %v132 = vshrl.u32 %v131, 7
    %v133 = vsub.s32 %v130, %v132
    %v134 = vrot.slane %v78, %v133
    %vm135 = vcmask 261312
    %v136 = vsel %vm135, %v134, %v129
    %v137 = vlaneseq
    %v138 = vshrl.u32 %v137, 7
    %v139 = vsub.s32 %v111, %v138
    %v140 = vrot.slane %v81, %v139
    %v141 = vlaneseq
    %v142 = vshrl.u32 %v141, 7
    %v143 = vsub.s32 %v116, %v142
    %v144 = vrot.slane %v84, %v143
    %v145 = vsel %vm121, %v144, %v140
    %v146 = vlaneseq
    %v147 = vshrl.u32 %v146, 7
    %v148 = vsub.s32 %v123, %v147
    %v149 = vrot.slane %v87, %v148
    %v150 = vsel %vm128, %v149, %v145
    %v151 = vlaneseq
    %v152 = vshrl.u32 %v151, 7
    %v153 = vsub.s32 %v130, %v152
    %v154 = vrot.slane %v90, %v153
    %v155 = vsel %vm135, %v154, %v150
    %vm156 = vcmask 1041409
    %v157 = vsel %vm156, %v155, %v136
    %vm158 = vcmask 261120
    %v159 = vsel %vm158, %v157, 0
    %161 = vmatprep.subr.mxu0 0.0
    %162 = vmatpush1.msra.mxu0 0.0
    %163 = vmatprep.subr.mxu0 0.0
    %164 = vmatpush1.msra.mxu0 0.0
    %165 = vmatprep.subr.mxu0 0.0
    %166 = vmatpush1.msra.mxu0 0.0
    %167 = vmatprep.subr.mxu0 0.0
    %168 = vmatpush1.msra.mxu0 0.0
    %169 = vmatprep.subr.mxu0 0.0
    %170 = vmatpush1.msra.mxu0 0.0
    %171 = vmatprep.subr.mxu0 0.0
    %172 = vmatpush1.msra.mxu0 0.0
    %173 = vmatprep.subr.mxu0 0.0
    %174 = vmatpush1.msra.mxu0 0.0
    %175 = vmatprep.subr.mxu0 0.0
    %176 = vmatpush1.msra.mxu0 0.0
    %177 = vmatprep.subr.mxu0 0.0
    %178 = vmatpush1.msra.mxu0 0.0
    %179 = vmatprep.subr.mxu0 0.0
    %180 = vmatpush1.msra.mxu0 0.0
    %181 = vmatprep.subr.mxu0 0.0
    %182 = vmatpush1.msra.mxu0 0.0
    %183 = vmatprep.subr.mxu0 0.0
    %184 = vmatpush1.msra.mxu0 0.0
    %185 = vmatprep.subr.mxu0 0.0
    %186 = vmatpush1.msra.mxu0 %v94
    %187 = vmatprep.subr.mxu0 0.0
    %188 = vmatpush1.msra.mxu0 %v93
    %189 = vmatprep.subr.mxu0 0.0
    %190 = vmatpush1.msra.mxu0 %v92
    %191 = vmatprep.subr.mxu0 0.0
    %192 = vmatpush1.msra.mxu0 %v91
    %193 = vmatprep.subr.mxu0 0.0
    %194 = vmatpush2.msra.mxu0 0.0
    %195 = vmatprep.subr.mxu0 0.0
    %196 = vmatpush2.msra.mxu0 0.0
    %197 = vmatprep.subr.mxu0 0.0
    %198 = vmatpush2.msra.mxu0 0.0
    %199 = vmatprep.subr.mxu0 0.0
    %200 = vmatpush2.msra.mxu0 0.0
    %201 = vmatprep.subr.mxu0 0.0
    %202 = vmatpush2.msra.mxu0 0.0
    %203 = vmatprep.subr.mxu0 0.0
    %204 = vmatpush2.msra.mxu0 0.0
    %205 = vmatprep.subr.mxu0 0.0
    %206 = vmatpush2.msra.mxu0 0.0
    %207 = vmatprep.subr.mxu0 0.0
    %208 = vmatpush2.msra.mxu0 0.0
    %209 = vmatprep.subr.mxu0 0.0
    %210 = vmatpush2.msra.mxu0 0.0
    %211 = vmatprep.subr.mxu0 0.0
    %212 = vmatpush2.msra.mxu0 0.0
    %213 = vmatprep.subr.mxu0 0.0
    %214 = vmatpush2.msra.mxu0 0.0
    %215 = vmatprep.subr.mxu0 0.0
    %216 = vmatpush2.msra.mxu0 0.0
    %217 = vmatprep.subr.mxu0 0.0
    %218 = vmatpush2.msra.mxu0 0.0
    %219 = vmatprep.subr.mxu0 0.0
    %220 = vmatpush2.msra.mxu0 0.0
    %221 = vmatprep.subr.mxu0 0.0
    %222 = vmatpush2.msra.mxu0 0.0
    %223 = vmatprep.subr.mxu0 0.0
    %224 = vmatpush2.msra.mxu0 0.0
    %225 = vmatprep.mubr.f32.mxu0 0.0
    %226 = vmatmul.mubr.f32.gmra.mxu0 %v159
    %v227 = vpop.f32.mrf.mxu0
    %v228 = vadd.f32 %v100, %v227
    %v229 = vpop.f32.mrf.mxu0
    %230 = vdwg.mxu0
    %v231 = vmul.f32 %v228, %v228
    %vm232 = vcmask 1041408
    %v233 = vsel %vm232, %v231, 0.0
    %234 = vadd.xlane.f32.xlu0 %v233
    %v235 = vpop.xlane.xlu0 %234
    %v236 = vmax.f32 %v235, 1e-24
    %v237 = vrsqrt.pop %v236
    %v238 = vmul.f32 %v228, %v237
    %239 = vst [vmem:[#allocation7] sm:$0x3] %v238
    // Predicated region
    $region22: #{tpu_custom_call.1} parent=1 // pred_check
      _
    $region23: #{tpu_custom_call.1} parent=1 // pred_check_branch
      %241 = sbr.rel (0) target = $region25
    $region24: #{tpu_custom_call.1} parent=1 // pred_region
      %s243 = ssub.s32 32, 32
      %244 = vsyncadd [#allocation4], %s243
      %s246 = sshll.u32 [#allocation7], 4
      %s247 = int_to_ptr.vmem [resolvable:$true] %s246
      %249 = dma.vmem_to_hbm [thread:$0]  %s247, 32, %s3, [#allocation4]
    $region25: #{tpu_custom_call.1} parent=1 // pred_fallthru
      _
    // Predicated region
    $region26: #{tpu_custom_call.1} parent=1 // pred_check
      _
    $region27: #{tpu_custom_call.1} parent=1 // pred_check_branch
      %251 = sbr.rel (0) target = $region29
    $region28: #{tpu_custom_call.1} parent=1 // pred_region
      %252 = dma.done [#allocation4], 32
    $region29: #{tpu_custom_call.1} parent=1 // pred_fallthru
      _
    %253 = vsyncpa [#allocation3], 1
    %254 = vsyncpa [#allocation6], 1
    %255 = vsyncpa [#allocation4], 1

</llo_original>
